<compile_context>
chip_gen: v7x
topology: tpu7x:2x2x1
jax: 0.10.0
libtpu: 0.0.40
codegen_flags: <defaults>
</compile_context>

<pallas_src>
import functools

import jax
import jax.numpy as jnp
from jax.experimental import pallas as pl
from jax.experimental.pallas import tpu as pltpu


def _round_up(x: int, m: int) -> int:
    return ((x + m - 1) // m) * m


def _vmem_capacity_bytes() -> int:
    """Physical VMEM per TensorCore; conservative fallback (v7x = 64 MiB)."""
    try:
        info = pltpu.get_tpu_info()
        cap = getattr(info, "vmem_capacity_bytes", None)
        if cap:
            return int(cap)
    except Exception:
        pass
    return 64 << 20


def _num_tensorcores() -> int:
    """TensorCores per chip; conservative fallback of 1 (v5e/v6e)."""
    try:
        info = pltpu.get_tpu_info()
        for attr in ("num_tensorcores", "tensorcores_per_chip",
                     "num_cores", "cores_per_chip"):
            v = getattr(info, attr, None)
            if v:
                return int(v)
        ver = getattr(info, "chip_version", None)
        if ver is not None and "7" in str(ver):
            return 2  # v7x has 2 TensorCores per chip
    except Exception:
        pass
    return 1


def _rmsnorm_kernel(x_ref, w_ref, o_ref, *, eps: float, exact_rounding: bool):
    # x_ref: (block_rows, dim) in x dtype; w_ref: (1, dim) float32 (pre-cast
    # once in the wrapper, resident in VMEM via the constant (0, 0) index_map);
    # o_ref: (block_rows, dim) in the promoted output dtype.
    #
    # NOTE: with a ragged last grid block the trailing rows of x_ref hold
    # garbage.  That is safe because every statistic below is per-row and the
    # corresponding output rows are masked out of the store.  Keep it that way.
    x = x_ref[...].astype(jnp.float32)                    # x.float()
    ms = jnp.mean(x * x, axis=-1, keepdims=True)          # mean(x**2, -1, keepdim)
    inv_rms = jax.lax.rsqrt(ms + eps)                     # 1/sqrt(ms + eps)
    normed = x * inv_rms
    if exact_rounding and x_ref.dtype != jnp.float32:
        # Match torch rounding order exactly: .type_as(x) rounds to x.dtype
        # before the (promoting) multiply by the float32 weight.
        normed = normed.astype(x_ref.dtype).astype(jnp.float32)
    o_ref[...] = (normed * w_ref[...]).astype(o_ref.dtype)


def _pick_block_rows(rows: int, dim: int, itemsize: int, out_itemsize: int,
                     vmem_cap: int, num_cores: int) -> int:
    """Sublane-aligned row tile sized for a pure HBM-bandwidth-bound kernel."""
    # Sublane packing: f32 -> 8, bf16/f16 -> 16, int8/fp8 -> 32.
    sublane = {4: 8, 2: 16, 1: 32}.get(itemsize, 8)

    # Live VMEM per row: 2x double-buffered input (x dtype) + 2x double-
    # buffered output (out dtype) + the f32 working copies the kernel
    # materializes (upcast tile + normalized tile for sub-32-bit inputs).
    f32_tmp_per_row = (8 if itemsize < 4 else 4) * dim
    bytes_per_row_live = (2 * itemsize + 2 * out_itemsize) * dim + f32_tmp_per_row
    budget = int(vmem_cap * 0.6)
    br_cap = max(sublane, (budget // max(bytes_per_row_live, 1)) // sublane * sublane)

    # Target x-dtype tile size: ~8 MiB for f32 (v7x: ~2.5 us DMA per 4 MiB at
    # 3.2 TB/s, so 8 MiB keeps the ~0.35 us/step overhead <~7%); ~5 MiB for
    # sub-32-bit dtypes since their f32 temporaries multiply the live VMEM
    # footprint.  v5e/v6e (slower HBM, 128 MiB VMEM) are already fine at this.
    target_tile_bytes = (8 << 20) if itemsize >= 4 else (5 << 20)
    br = max(sublane, (target_tile_bytes // (dim * itemsize)) // sublane * sublane)
    br = min(br, br_cap)

    rows_aligned = _round_up(rows, sublane)
    if br >= rows_aligned:
        # Whole problem fits in one tile.  Only split into two blocks when the
        # chip actually has two TensorCores to shard the parallel axis across;
        # on 1-TC chips a split just adds a pipeline step for zero parallelism.
        if num_cores >= 2 and rows_aligned >= 2 * sublane:
            br = _round_up(pl.cdiv(rows_aligned, 2), sublane)
        else:
            br = rows_aligned
    elif num_cores >= 2:
        # Prefer a block count that shards evenly across the TensorCores.
        nb = pl.cdiv(rows, br)
        if nb > 1 and nb % num_cores != 0:
            nb_even = _round_up(nb, num_cores)
            br_even = _round_up(pl.cdiv(rows, nb_even), sublane)
            if br_even >= sublane:
                br = br_even
    return br


def rmsnorm(x: jax.Array, weight: jax.Array, eps: float = 1e-6,
            block_rows=None, exact_rounding: bool = True) -> jax.Array:
    """Apply RMSNorm over the last axis of x using a Pallas TPU kernel."""
    orig_shape = x.shape
    dim = orig_shape[-1]
    assert weight.shape == (dim,)

    rows = 1
    for s in orig_shape[:-1]:
        rows *= s
    x2d = x.reshape(rows, dim)
    # Pre-cast the weight once in the wrapper; its (1, dim) tile stays resident
    # in VMEM via the constant (0, 0) index_map (no per-step convert / re-DMA).
    w2d = weight.astype(jnp.float32).reshape(1, dim)

    # Torch promotion: normed.type_as(x) * weight(f32) -> promoted dtype.
    out_dtype = jnp.promote_types(x.dtype, weight.dtype)
    itemsize = jnp.dtype(x.dtype).itemsize
    out_itemsize = jnp.dtype(out_dtype).itemsize
    sublane = {4: 8, 2: 16, 1: 32}.get(itemsize, 8)

    vmem_cap = _vmem_capacity_bytes()
    num_cores = _num_tensorcores()
    if block_rows is not None:
        # Validate/round a caller-supplied tile so the (8, 128) tiling
        # constraint is never violated.
        br = max(sublane, _round_up(int(block_rows), sublane))
    else:
        br = _pick_block_rows(rows, dim, itemsize, out_itemsize, vmem_cap, num_cores)

    # cdiv grid, no wrapper-side padding: the ragged last block is handled by
    # Pallas (masked partial output store); see the NOTE in the kernel body.
    num_blocks = int(pl.cdiv(rows, br))

    # Explicit VMEM limit sized to double-buffered live tiles plus the f32
    # working copies (+ headroom); don't rely on the scoped default for large
    # tiles.  Clamp below physical VMEM (64 MiB on v7x).
    tile_in_bytes = br * dim * itemsize
    tile_out_bytes = br * dim * out_itemsize
    f32_tmp_bytes = (2 if itemsize < 4 else 1) * br * dim * 4
    live_bytes = 2 * tile_in_bytes + 2 * tile_out_bytes + f32_tmp_bytes + dim * 4
    vmem_limit = int(live_bytes * 1.5) + (1 << 20)
    vmem_limit = min(max(vmem_limit, 16 << 20), int(vmem_cap * 0.9))

    # Advisory cost hint (real element counts, both streams): pure HBM bandwidth.
    cost = pl.CostEstimate(
        flops=4 * rows * dim,
        transcendentals=rows,
        bytes_accessed=rows * dim * itemsize + rows * dim * out_itemsize + dim * 4,
    )

    # TODO(synk): for dim < 128 (e.g. the dim=32 toy case) loads/stores use a
    # fraction of the 128 lanes; production hidden sizes (multiples of 128)
    # are lane-dense.  A wrapper-side pack of several rows into the lane axis
    # would need a segmented in-kernel reduction and is not done here.
    out2d = pl.pallas_call(
        functools.partial(_rmsnorm_kernel, eps=eps, exact_rounding=exact_rounding),
        out_shape=jax.ShapeDtypeStruct((rows, dim), out_dtype),
        grid_spec=pltpu.PrefetchScalarGridSpec(
            num_scalar_prefetch=0,
            grid=(num_blocks,),
            in_specs=[
                pl.BlockSpec((br, dim), lambda i: (i, 0)),   # x row tile
                pl.BlockSpec((1, dim), lambda i: (0, 0)),    # weight (resident)
            ],
            out_specs=pl.BlockSpec((br, dim), lambda i: (i, 0)),
        ),
        compiler_params=pltpu.CompilerParams(
            dimension_semantics=("parallel",),
            vmem_limit_bytes=vmem_limit,
        ),
        cost_estimate=cost,
    )(x2d, w2d)

    return out2d.reshape(orig_shape)


def rmsnorm_reference(x, weight, eps=1e-6):
    out_dtype = jnp.promote_types(x.dtype, weight.dtype)
    xf = x.astype(jnp.float32)
    ms = jnp.mean(xf * xf, axis=-1, keepdims=True)
    normed = (xf / jnp.sqrt(ms + eps)).astype(x.dtype)
    return (normed.astype(jnp.float32) * weight.astype(jnp.float32)).astype(out_dtype)


if __name__ == "__main__":
    key = jax.random.PRNGKey(0)
    batch, seq, hidden = 2, 8, 32

    x = jax.random.normal(key, (batch, seq, hidden), dtype=jnp.float32)
    # Deterministic parameter init, matching nn.Parameter(torch.ones(dim)).
    weight = jnp.ones((hidden,), dtype=jnp.float32)

    out = rmsnorm(x, weight, eps=1e-6)
    out = jax.block_until_ready(out)

    ref = rmsnorm_reference(x, weight, eps=1e-6)
    assert out.shape == x.shape and out.dtype == ref.dtype
    assert jnp.allclose(out, ref, atol=1e-5, rtol=1e-5), "mismatch vs reference"

    print("KERNEL_OK")
</pallas_src>

<mosaic_0001>
module attributes {stable_mosaic.version = 11 : i64} {
  func.func @_rmsnorm_kernel(%arg0: i32, %arg1: memref<16x32xf32, #tpu.memory_space<vmem>>, %arg2: memref<1x32xf32, #tpu.memory_space<vmem>>, %arg3: memref<16x32xf32, #tpu.memory_space<vmem>>) attributes {dimension_semantics = [#tpu.dimension_semantics<parallel>], iteration_bounds = array<i64: 1>, scalar_prefetch = 0 : i64, scratch_operands = 0 : i64, tpu.core_type = #tpu.core_type<tc>, window_params = [{transform_indices = @transform_0, window_bounds = array<i64: 16, 32>}, {pipeline_mode = #tpu.pipeline_mode<synchronous>, transform_indices = @transform_1, window_bounds = array<i64: 1, 32>}, {transform_indices = @transform_2, window_bounds = array<i64: 16, 32>}]} {
    %c0 = arith.constant 0 : index
    %c0_0 = arith.constant 0 : index
    %0 = vector.load %arg1[%c0, %c0_0] : memref<16x32xf32, #tpu.memory_space<vmem>>, vector<16x32xf32>
    %1 = arith.mulf %0, %0 : vector<16x32xf32>
    %cst = arith.constant dense<0.000000e+00> : vector<16xf32>
    %2 = vector.multi_reduction <add>, %1, %cst [1] : vector<16x32xf32> to vector<16xf32>
    %3 = vector.shape_cast %2 : vector<16xf32> to vector<16x1xf32>
    %cst_1 = arith.constant 3.200000e+01 : f32
    %4 = vector.broadcast %cst_1 : f32 to vector<16x1xf32>
    %5 = arith.divf %3, %4 : vector<16x1xf32>
    %cst_2 = arith.constant 9.99999997E-7 : f32
    %6 = vector.broadcast %cst_2 : f32 to vector<16x1xf32>
    %7 = arith.addf %5, %6 : vector<16x1xf32>
    %8 = math.rsqrt %7 : vector<16x1xf32>
    %9 = vector.broadcast %8 : vector<16x1xf32> to vector<16x32xf32>
    %10 = arith.mulf %0, %9 : vector<16x32xf32>
    %c0_3 = arith.constant 0 : index
    %c0_4 = arith.constant 0 : index
    %11 = vector.load %arg2[%c0_3, %c0_4] : memref<1x32xf32, #tpu.memory_space<vmem>>, vector<1x32xf32>
    %12 = vector.broadcast %11 : vector<1x32xf32> to vector<16x32xf32>
    %13 = arith.mulf %10, %12 : vector<16x32xf32>
    %c0_5 = arith.constant 0 : index
    %c0_6 = arith.constant 0 : index
    %14 = vector.load %arg3[%c0_5, %c0_6] : memref<16x32xf32, #tpu.memory_space<vmem>>, vector<16x32xf32>
    tpu.vector_store %arg3[%c0_5, %c0_6], %13 {strides = array<i32>} : memref<16x32xf32, #tpu.memory_space<vmem>>, vector<16x32xf32>,
    return
  }
  func.func @transform_0(%arg0: i32) -> (i32, i32) {
    %c0_i32 = arith.constant 0 : i32
    %c0_i32_0 = arith.constant 0 : i32
    return %arg0, %c0_i32 : i32, i32
  }
  func.func @transform_1(%arg0: i32) -> (i32, i32) {
    %c0_i32 = arith.constant 0 : i32
    %c0_i32_0 = arith.constant 0 : i32
    %c0_i32_1 = arith.constant 0 : i32
    return %c0_i32, %c0_i32_0 : i32, i32
  }
  func.func @transform_2(%arg0: i32) -> (i32, i32) {
    %c0_i32 = arith.constant 0 : i32
    %c0_i32_0 = arith.constant 0 : i32
    return %arg0, %c0_i32 : i32, i32
  }
}

</mosaic_0001>

<llo_original>
// kernel: tpu_custom_call.1
$region0: #{tpu_custom_call.1}
  #allocation0 [shape = 'u32[]', space=smem, size = 0x4, offset = 0x4, fixed_abs, tag = 'smem constant byte address 0x4 - core index']
  #allocation1 [shape = 'u32[144,128]{1,0:T(1,128)}', space=vmem, size = 0x12000, scoped, tag = 'internal scratch']
  %s0 = inlined_call_operand.hbm [shape: f32[16,32], index: 0, kind: input, shape index: {}]
  %s1 = inlined_call_operand.vmem [shape: f32[1,32], index: 1, kind: input, shape index: {}]
  %s2 = inlined_call_operand.hbm [shape: f32[16,32], index: 2, kind: output, shape index: {}]
  %s3 = sld [smem:[#allocation0]]
  $region22: #{tpu_custom_call.1} parent=0
    _
  %s5 = ssub.s32 1, %s3
  %s6 = scalar_select 0, %s5, %s3
  $region1: #{tpu_custom_call.1} parent=0
    #allocation2 [shape = 'u8[8192]{0}', space=vmem, size = 0x2000, scoped, tag = 'input window, operand 0, single buffered']
    #allocation3 [shape = 's32[1]{0}', space=sflag, size = 0x4, scoped, tag = 'scoped memory for tpu_custom_call.1']
    #allocation4 [shape = 's32[1]{0}', space=sflag, size = 0x4, scoped, tag = 'scoped memory for tpu_custom_call.1']
    #allocation5 [shape = 'u8[8192]{0}', space=vmem, size = 0x2000, scoped, tag = 'output window, operand 0, single buffered']
    %7 = vsyncpa [#allocation3], 0
    %8 = vsyncpa [#allocation4], 0
    // Predicated region
    $region2: #{tpu_custom_call.1} parent=1 // pred_check
      _
    $region3: #{tpu_custom_call.1} parent=1 // pred_check_branch
      %10 = sbr.rel (0) target = $region5
    $region4: #{tpu_custom_call.1} parent=1 // pred_region
      %s12 = ssub.s32 256, 256
      %13 = vsyncadd [#allocation3], %s12
      %s14 = sshll.u32 [#allocation2], 4
      %s15 = int_to_ptr.vmem [resolvable:$true] %s14
      %20 = dma.hbm_to_vmem [thread:$0]  %s0, 256, %s15, [#allocation3], 128, 128, 8
    $region5: #{tpu_custom_call.1} parent=1 // pred_fallthru
      _
    // Predicated region
    $region6: #{tpu_custom_call.1} parent=1 // pred_check
      _
    $region7: #{tpu_custom_call.1} parent=1 // pred_check_branch
      %22 = sbr.rel (0) target = $region9
    $region8: #{tpu_custom_call.1} parent=1 // pred_region
      _
    $region9: #{tpu_custom_call.1} parent=1 // pred_fallthru
      _
    // Predicated region
    $region10: #{tpu_custom_call.1} parent=1 // pred_check
      _
    $region11: #{tpu_custom_call.1} parent=1 // pred_check_branch
      %24 = sbr.rel (0) target = $region13
    $region12: #{tpu_custom_call.1} parent=1 // pred_region
      %25 = dma.done [#allocation3], 256
    $region13: #{tpu_custom_call.1} parent=1 // pred_fallthru
      _
    %v26 = vld [vmem:[#allocation2] sm:$0xff]
    %v27 = vld [vmem:[#allocation2 + $0x8] sm:$0xff]
    %v28 = vmul.f32 %v26, %v26
    %v29 = vmul.f32 %v27, %v27
    %vm30 = vcmask 261120
    %v31 = vsel %vm30, %v28, 0.0
    %32 = vadd.xlane.f32.xlu0 %v31
    %v33 = vpop.xlane.xlu0 %32
    %v34 = vsel %vm30, %v29, 0.0
    %35 = vadd.xlane.f32.xlu0 %v34
    %v36 = vpop.xlane.xlu0 %35
    %v37 = vrcp.pop 32.0
    %v38 = vmul.f32 %v33, %v37
    %v39 = vmul.f32 %v36, %v37
    %v40 = vadd.f32 %v38, 1e-06
    %v41 = vadd.f32 %v39, 1e-06
    %v42 = vrsqrt.pop %v40
    %v43 = vrsqrt.pop %v41
    %v44 = vmul.f32 %v26, %v42
    %v45 = vmul.f32 %v27, %v43
    %v46 = vld [vmem:[%s1] sm:$0x1]
    %v48 = vlaneseq
    %v49 = vshrl.u32 %v48, 7
    %v50 = vsub.s32 0, %v49
    %v51 = vrot.slane %v46, %v50
    %v53 = vmul.f32 %v44, %v51
    %v54 = vmul.f32 %v45, %v51
    %55 = vst.msk [vmem:[#allocation5] sm:$0xff] %vm30, %v53
    %56 = vst.msk [vmem:[#allocation5 + $0x8] sm:$0xff] %vm30, %v54
    // Predicated region
    $region14: #{tpu_custom_call.1} parent=1 // pred_check
      _
    $region15: #{tpu_custom_call.1} parent=1 // pred_check_branch
      %58 = sbr.rel (0) target = $region17
    $region16: #{tpu_custom_call.1} parent=1 // pred_region
      %s60 = ssub.s32 256, 256
      %61 = vsyncadd [#allocation4], %s60
      %s62 = sshll.u32 [#allocation5], 4
      %s63 = int_to_ptr.vmem [resolvable:$true] %s62
      %68 = dma.vmem_to_hbm [thread:$0]  %s63, 256, %s2, [#allocation4], 128, 128, 8
    $region17: #{tpu_custom_call.1} parent=1 // pred_fallthru
      _
    // Predicated region
    $region18: #{tpu_custom_call.1} parent=1 // pred_check
      _
    $region19: #{tpu_custom_call.1} parent=1 // pred_check_branch
      %70 = sbr.rel (0) target = $region21
    $region20: #{tpu_custom_call.1} parent=1 // pred_region
      %71 = dma.done [#allocation4], 256
    $region21: #{tpu_custom_call.1} parent=1 // pred_fallthru
      _
    %72 = vsyncpa [#allocation3], 1
    %73 = vsyncpa [#allocation4], 1

</llo_original>
